<compile_context>
chip_gen: v5e
topology: v5e:2x2
jax: 0.10.0
libtpu: 0.0.40
codegen_flags: <defaults>
</compile_context>

<pallas_src>
import jax
import jax.numpy as jnp
from jax.experimental import pallas as pl
from jax.experimental.pallas import tpu as pltpu

KSIZE = 17
PAD = 8
EPS = 1e-5


# ----------------------------- Pallas kernel ------------------------------

def _basic_block_kernel(xp_ref, w1_ref, w2_ref, s1_ref, b1_ref, s2_ref, b2_ref, o_ref):
    # xp_ref: (1, C, L+2*PAD) zero-padded input slab for one sample
    # w1_ref: (planes, K*C)   w2_ref: (planes, K*planes)   s*/b*: (planes, 1)
    # o_ref : (1, planes, L)
    C = xp_ref.shape[1]
    Lp = xp_ref.shape[2]
    L = Lp - 2 * PAD
    planes = o_ref.shape[1]

    xp = xp_ref[0]                                                             # (C, L+2*PAD)

    # ---- conv1 + bn1 + relu -------------------------------------------------
    # in-VMEM im2col: row (k*C + c) of cols1 is xp[c, k:k+L]
    cols1 = jnp.concatenate([xp[:, k:k + L] for k in range(KSIZE)], axis=0)    # (K*C, L)
    acc1 = jnp.dot(w1_ref[...], cols1, preferred_element_type=jnp.float32)     # (planes, L)
    y1 = jnp.maximum(acc1 * s1_ref[...] + b1_ref[...], 0.0)

    # ---- conv2 + bn2 + residual add + relu ----------------------------------
    zpad = jnp.zeros((planes, PAD), dtype=y1.dtype)
    y1p = jnp.concatenate([zpad, y1, zpad], axis=1)                            # (planes, L+2*PAD)
    cols2 = jnp.concatenate([y1p[:, k:k + L] for k in range(KSIZE)], axis=0)   # (K*planes, L)
    acc2 = jnp.dot(w2_ref[...], cols2, preferred_element_type=jnp.float32)     # (planes, L)

    identity = xp[:, PAD:PAD + L]                                              # (C, L) == (planes, L)
    y2 = jnp.maximum(acc2 * s2_ref[...] + b2_ref[...] + identity, 0.0)
    o_ref[0] = y2.astype(o_ref.dtype)


# ------------------------------- JAX glue ----------------------------------

def _fold_bn(gamma, beta, mean, var, eps=EPS):
    scale = gamma / jnp.sqrt(var + eps)
    bias = beta - mean * scale
    return scale[:, None].astype(jnp.float32), bias[:, None].astype(jnp.float32)


def basic_block_forward(x, params):
    """x: (N, C, L) float32; inplanes == planes, stride=1, downsample=None."""
    N, C, L = x.shape
    planes = params["w1"].shape[0]
    assert planes == C, "downsample=None requires inplanes == planes"

    # zero-pad once along L so the kernel only does lane shifts (no boundary logic)
    xp = jnp.pad(x, ((0, 0), (0, 0), (PAD, PAD)))                              # (N, C, L+16)
    Lp = L + 2 * PAD

    # conv weights (O, I, K) -> (O, K*I); row order matches in-kernel concat (k major, c minor)
    w1m = jnp.transpose(params["w1"], (0, 2, 1)).reshape(planes, KSIZE * C)
    w2m = jnp.transpose(params["w2"], (0, 2, 1)).reshape(planes, KSIZE * planes)

    s1, b1 = _fold_bn(params["g1"], params["beta1"], params["m1"], params["v1"])
    s2, b2 = _fold_bn(params["g2"], params["beta2"], params["m2"], params["v2"])

    def rep(shape):  # broadcast (grid-invariant) operand
        return pl.BlockSpec(shape, lambda n: (0, 0))

    return pl.pallas_call(
        _basic_block_kernel,
        out_shape=jax.ShapeDtypeStruct((N, planes, L), x.dtype),
        grid_spec=pltpu.PrefetchScalarGridSpec(
            num_scalar_prefetch=0,
            grid=(N,),
            in_specs=[
                pl.BlockSpec((1, C, Lp), lambda n: (n, 0, 0)),
                rep((planes, KSIZE * C)),
                rep((planes, KSIZE * planes)),
                rep((planes, 1)),
                rep((planes, 1)),
                rep((planes, 1)),
                rep((planes, 1)),
            ],
            out_specs=pl.BlockSpec((1, planes, L), lambda n: (n, 0, 0)),
        ),
        compiler_params=pltpu.CompilerParams(
            dimension_semantics=("parallel",),
            vmem_limit_bytes=32 * 1024 * 1024,
        ),
    )(xp, w1m, w2m, s1, b1, s2, b2)


# ----------------------------- reference (JAX) -----------------------------

def _ref_forward(x, params):
    def conv(x_, w_):
        return jax.lax.conv_general_dilated(
            x_, w_, window_strides=(1,), padding=[(PAD, PAD)],
            dimension_numbers=("NCH", "OIH", "NCH"))

    def bn(y, g, b, m, v):
        return (y - m[None, :, None]) / jnp.sqrt(v[None, :, None] + EPS) \
            * g[None, :, None] + b[None, :, None]

    out = jax.nn.relu(bn(conv(x, params["w1"]),
                         params["g1"], params["beta1"], params["m1"], params["v1"]))
    out = bn(conv(out, params["w2"]),
             params["g2"], params["beta2"], params["m2"], params["v2"])
    return jax.nn.relu(out + x)


# --------------------------------- main ------------------------------------

if __name__ == "__main__":
    key = jax.random.PRNGKey(0)
    N, C, L = 2, 8, 256         # inplanes == planes == 8 (downsample=None); L lane-dense
    planes = C

    ks = jax.random.split(key, 11)
    x = jax.random.normal(ks[0], (N, C, L), dtype=jnp.float32)
    params = {
        "w1": 0.1 * jax.random.normal(ks[1], (planes, C, KSIZE), dtype=jnp.float32),
        "w2": 0.1 * jax.random.normal(ks[2], (planes, planes, KSIZE), dtype=jnp.float32),
        "g1": 1.0 + 0.1 * jax.random.normal(ks[3], (planes,), dtype=jnp.float32),
        "beta1": 0.1 * jax.random.normal(ks[4], (planes,), dtype=jnp.float32),
        "m1": 0.1 * jax.random.normal(ks[5], (planes,), dtype=jnp.float32),
        "v1": jax.random.uniform(ks[6], (planes,), minval=0.5, maxval=1.5, dtype=jnp.float32),
        "g2": 1.0 + 0.1 * jax.random.normal(ks[7], (planes,), dtype=jnp.float32),
        "beta2": 0.1 * jax.random.normal(ks[8], (planes,), dtype=jnp.float32),
        "m2": 0.1 * jax.random.normal(ks[9], (planes,), dtype=jnp.float32),
        "v2": jax.random.uniform(ks[10], (planes,), minval=0.5, maxval=1.5, dtype=jnp.float32),
    }

    out = jax.block_until_ready(basic_block_forward(x, params))
    ref = jax.block_until_ready(_ref_forward(x, params))

    assert out.shape == (N, planes, L), out.shape
    assert jnp.allclose(out, ref, atol=1e-2, rtol=1e-2), float(jnp.max(jnp.abs(out - ref)))
    print("KERNEL_OK")
</pallas_src>

<mosaic_0001>
module attributes {stable_mosaic.version = 11 : i64} {
  func.func @_basic_block_kernel(%arg0: i32, %arg1: memref<1x8x272xf32, #tpu.memory_space<vmem>>, %arg2: memref<8x136xf32, #tpu.memory_space<vmem>>, %arg3: memref<8x136xf32, #tpu.memory_space<vmem>>, %arg4: memref<8x1xf32, #tpu.memory_space<vmem>>, %arg5: memref<8x1xf32, #tpu.memory_space<vmem>>, %arg6: memref<8x1xf32, #tpu.memory_space<vmem>>, %arg7: memref<8x1xf32, #tpu.memory_space<vmem>>, %arg8: memref<1x8x256xf32, #tpu.memory_space<vmem>>) attributes {dimension_semantics = [#tpu.dimension_semantics<parallel>], iteration_bounds = array<i64: 2>, scalar_prefetch = 0 : i64, scratch_operands = 0 : i64, tpu.core_type = #tpu.core_type<tc>, window_params = [{transform_indices = @transform_0, window_bounds = array<i64: 1, 8, 272>}, {pipeline_mode = #tpu.pipeline_mode<synchronous>, transform_indices = @transform_1, window_bounds = array<i64: 8, 136>}, {pipeline_mode = #tpu.pipeline_mode<synchronous>, transform_indices = @transform_2, window_bounds = array<i64: 8, 136>}, {pipeline_mode = #tpu.pipeline_mode<synchronous>, transform_indices = @transform_3, window_bounds = array<i64: 8, 1>}, {pipeline_mode = #tpu.pipeline_mode<synchronous>, transform_indices = @transform_4, window_bounds = array<i64: 8, 1>}, {pipeline_mode = #tpu.pipeline_mode<synchronous>, transform_indices = @transform_5, window_bounds = array<i64: 8, 1>}, {pipeline_mode = #tpu.pipeline_mode<synchronous>, transform_indices = @transform_6, window_bounds = array<i64: 8, 1>}, {transform_indices = @transform_7, window_bounds = array<i64: 1, 8, 256>}]} {
    %c0 = arith.constant 0 : index
    %c0_0 = arith.constant 0 : index
    %c0_1 = arith.constant 0 : index
    %0 = vector.load %arg1[%c0, %c0_0, %c0_1] : memref<1x8x272xf32, #tpu.memory_space<vmem>>, vector<1x8x272xf32>
    %1 = vector.shape_cast %0 : vector<1x8x272xf32> to vector<8x272xf32>
    %2 = vector.extract_strided_slice %1 {offsets = [0, 0], sizes = [8, 256], strides = [1, 1]} : vector<8x272xf32> to vector<8x256xf32>
    %3 = vector.extract_strided_slice %1 {offsets = [0, 1], sizes = [8, 256], strides = [1, 1]} : vector<8x272xf32> to vector<8x256xf32>
    %4 = vector.extract_strided_slice %1 {offsets = [0, 2], sizes = [8, 256], strides = [1, 1]} : vector<8x272xf32> to vector<8x256xf32>
    %5 = vector.extract_strided_slice %1 {offsets = [0, 3], sizes = [8, 256], strides = [1, 1]} : vector<8x272xf32> to vector<8x256xf32>
    %6 = vector.extract_strided_slice %1 {offsets = [0, 4], sizes = [8, 256], strides = [1, 1]} : vector<8x272xf32> to vector<8x256xf32>
    %7 = vector.extract_strided_slice %1 {offsets = [0, 5], sizes = [8, 256], strides = [1, 1]} : vector<8x272xf32> to vector<8x256xf32>
    %8 = vector.extract_strided_slice %1 {offsets = [0, 6], sizes = [8, 256], strides = [1, 1]} : vector<8x272xf32> to vector<8x256xf32>
    %9 = vector.extract_strided_slice %1 {offsets = [0, 7], sizes = [8, 256], strides = [1, 1]} : vector<8x272xf32> to vector<8x256xf32>
    %10 = vector.extract_strided_slice %1 {offsets = [0, 8], sizes = [8, 256], strides = [1, 1]} : vector<8x272xf32> to vector<8x256xf32>
    %11 = vector.extract_strided_slice %1 {offsets = [0, 9], sizes = [8, 256], strides = [1, 1]} : vector<8x272xf32> to vector<8x256xf32>
    %12 = vector.extract_strided_slice %1 {offsets = [0, 10], sizes = [8, 256], strides = [1, 1]} : vector<8x272xf32> to vector<8x256xf32>
    %13 = vector.extract_strided_slice %1 {offsets = [0, 11], sizes = [8, 256], strides = [1, 1]} : vector<8x272xf32> to vector<8x256xf32>
    %14 = vector.extract_strided_slice %1 {offsets = [0, 12], sizes = [8, 256], strides = [1, 1]} : vector<8x272xf32> to vector<8x256xf32>
    %15 = vector.extract_strided_slice %1 {offsets = [0, 13], sizes = [8, 256], strides = [1, 1]} : vector<8x272xf32> to vector<8x256xf32>
    %16 = vector.extract_strided_slice %1 {offsets = [0, 14], sizes = [8, 256], strides = [1, 1]} : vector<8x272xf32> to vector<8x256xf32>
    %17 = vector.extract_strided_slice %1 {offsets = [0, 15], sizes = [8, 256], strides = [1, 1]} : vector<8x272xf32> to vector<8x256xf32>
    %18 = vector.extract_strided_slice %1 {offsets = [0, 16], sizes = [8, 256], strides = [1, 1]} : vector<8x272xf32> to vector<8x256xf32>
    %19 = tpu.concatenate %2, %3, %4, %5, %6, %7, %8, %9, %10, %11, %12, %13, %14, %15, %16, %17 in 0 : vector<8x256xf32>, vector<8x256xf32>, vector<8x256xf32>, vector<8x256xf32>, vector<8x256xf32>, vector<8x256xf32>, vector<8x256xf32>, vector<8x256xf32>, vector<8x256xf32>, vector<8x256xf32>, vector<8x256xf32>, vector<8x256xf32>, vector<8x256xf32>, vector<8x256xf32>, vector<8x256xf32>, vector<8x256xf32> -> vector<128x256xf32>
    %20 = tpu.concatenate %19, %18 in 0 : vector<128x256xf32>, vector<8x256xf32> -> vector<136x256xf32>
    %c0_2 = arith.constant 0 : index
    %c0_3 = arith.constant 0 : index
    %21 = vector.load %arg2[%c0_2, %c0_3] : memref<8x136xf32, #tpu.memory_space<vmem>>, vector<8x136xf32>
    %cst = arith.constant dense<0.000000e+00> : vector<8x256xf32>
    %22 = tpu.matmul %21, %20, %cst {dimension_numbers = #tpu.dot_dimension_numbers<[1], [0], [0], [1], [0, 0, 1, 1], [], []>} : vector<8x136xf32>, vector<136x256xf32>, vector<8x256xf32> -> vector<8x256xf32>
    %c0_4 = arith.constant 0 : index
    %c0_5 = arith.constant 0 : index
    %23 = vector.load %arg4[%c0_4, %c0_5] : memref<8x1xf32, #tpu.memory_space<vmem>>, vector<8x1xf32>
    %24 = vector.broadcast %23 : vector<8x1xf32> to vector<8x256xf32>
    %25 = arith.mulf %22, %24 : vector<8x256xf32>
    %c0_6 = arith.constant 0 : index
    %c0_7 = arith.constant 0 : index
    %26 = vector.load %arg5[%c0_6, %c0_7] : memref<8x1xf32, #tpu.memory_space<vmem>>, vector<8x1xf32>
    %27 = vector.broadcast %26 : vector<8x1xf32> to vector<8x256xf32>
    %28 = arith.addf %25, %27 : vector<8x256xf32>
    %cst_8 = arith.constant 0.000000e+00 : f32
    %29 = vector.broadcast %cst_8 : f32 to vector<8x256xf32>
    %30 = arith.maximumf %28, %29 : vector<8x256xf32>
    %cst_9 = arith.constant 0.000000e+00 : f32
    %31 = vector.broadcast %cst_9 : f32 to vector<8x8xf32>
    %32 = tpu.concatenate %31, %30, %31 in 1 : vector<8x8xf32>, vector<8x256xf32>, vector<8x8xf32> -> vector<8x272xf32>
    %33 = vector.extract_strided_slice %32 {offsets = [0, 0], sizes = [8, 256], strides = [1, 1]} : vector<8x272xf32> to vector<8x256xf32>
    %34 = vector.extract_strided_slice %32 {offsets = [0, 1], sizes = [8, 256], strides = [1, 1]} : vector<8x272xf32> to vector<8x256xf32>
    %35 = vector.extract_strided_slice %32 {offsets = [0, 2], sizes = [8, 256], strides = [1, 1]} : vector<8x272xf32> to vector<8x256xf32>
    %36 = vector.extract_strided_slice %32 {offsets = [0, 3], sizes = [8, 256], strides = [1, 1]} : vector<8x272xf32> to vector<8x256xf32>
    %37 = vector.extract_strided_slice %32 {offsets = [0, 4], sizes = [8, 256], strides = [1, 1]} : vector<8x272xf32> to vector<8x256xf32>
    %38 = vector.extract_strided_slice %32 {offsets = [0, 5], sizes = [8, 256], strides = [1, 1]} : vector<8x272xf32> to vector<8x256xf32>
    %39 = vector.extract_strided_slice %32 {offsets = [0, 6], sizes = [8, 256], strides = [1, 1]} : vector<8x272xf32> to vector<8x256xf32>
    %40 = vector.extract_strided_slice %32 {offsets = [0, 7], sizes = [8, 256], strides = [1, 1]} : vector<8x272xf32> to vector<8x256xf32>
    %41 = vector.extract_strided_slice %32 {offsets = [0, 8], sizes = [8, 256], strides = [1, 1]} : vector<8x272xf32> to vector<8x256xf32>
    %42 = vector.extract_strided_slice %32 {offsets = [0, 9], sizes = [8, 256], strides = [1, 1]} : vector<8x272xf32> to vector<8x256xf32>
    %43 = vector.extract_strided_slice %32 {offsets = [0, 10], sizes = [8, 256], strides = [1, 1]} : vector<8x272xf32> to vector<8x256xf32>
    %44 = vector.extract_strided_slice %32 {offsets = [0, 11], sizes = [8, 256], strides = [1, 1]} : vector<8x272xf32> to vector<8x256xf32>
    %45 = vector.extract_strided_slice %32 {offsets = [0, 12], sizes = [8, 256], strides = [1, 1]} : vector<8x272xf32> to vector<8x256xf32>
    %46 = vector.extract_strided_slice %32 {offsets = [0, 13], sizes = [8, 256], strides = [1, 1]} : vector<8x272xf32> to vector<8x256xf32>
    %47 = vector.extract_strided_slice %32 {offsets = [0, 14], sizes = [8, 256], strides = [1, 1]} : vector<8x272xf32> to vector<8x256xf32>
    %48 = vector.extract_strided_slice %32 {offsets = [0, 15], sizes = [8, 256], strides = [1, 1]} : vector<8x272xf32> to vector<8x256xf32>
    %49 = vector.extract_strided_slice %32 {offsets = [0, 16], sizes = [8, 256], strides = [1, 1]} : vector<8x272xf32> to vector<8x256xf32>
    %50 = tpu.concatenate %33, %34, %35, %36, %37, %38, %39, %40, %41, %42, %43, %44, %45, %46, %47, %48 in 0 : vector<8x256xf32>, vector<8x256xf32>, vector<8x256xf32>, vector<8x256xf32>, vector<8x256xf32>, vector<8x256xf32>, vector<8x256xf32>, vector<8x256xf32>, vector<8x256xf32>, vector<8x256xf32>, vector<8x256xf32>, vector<8x256xf32>, vector<8x256xf32>, vector<8x256xf32>, vector<8x256xf32>, vector<8x256xf32> -> vector<128x256xf32>
    %51 = tpu.concatenate %50, %49 in 0 : vector<128x256xf32>, vector<8x256xf32> -> vector<136x256xf32>
    %c0_10 = arith.constant 0 : index
    %c0_11 = arith.constant 0 : index
    %52 = vector.load %arg3[%c0_10, %c0_11] : memref<8x136xf32, #tpu.memory_space<vmem>>, vector<8x136xf32>
    %cst_12 = arith.constant dense<0.000000e+00> : vector<8x256xf32>
    %53 = tpu.matmul %52, %51, %cst_12 {dimension_numbers = #tpu.dot_dimension_numbers<[1], [0], [0], [1], [0, 0, 1, 1], [], []>} : vector<8x136xf32>, vector<136x256xf32>, vector<8x256xf32> -> vector<8x256xf32>
    %54 = vector.extract_strided_slice %1 {offsets = [0, 8], sizes = [8, 256], strides = [1, 1]} : vector<8x272xf32> to vector<8x256xf32>
    %c0_13 = arith.constant 0 : index
    %c0_14 = arith.constant 0 : index
    %55 = vector.load %arg6[%c0_13, %c0_14] : memref<8x1xf32, #tpu.memory_space<vmem>>, vector<8x1xf32>
    %56 = vector.broadcast %55 : vector<8x1xf32> to vector<8x256xf32>
    %57 = arith.mulf %53, %56 : vector<8x256xf32>
    %c0_15 = arith.constant 0 : index
    %c0_16 = arith.constant 0 : index
    %58 = vector.load %arg7[%c0_15, %c0_16] : memref<8x1xf32, #tpu.memory_space<vmem>>, vector<8x1xf32>
    %59 = vector.broadcast %58 : vector<8x1xf32> to vector<8x256xf32>
    %60 = arith.addf %57, %59 : vector<8x256xf32>
    %61 = arith.addf %60, %54 : vector<8x256xf32>
    %cst_17 = arith.constant 0.000000e+00 : f32
    %62 = vector.broadcast %cst_17 : f32 to vector<8x256xf32>
    %63 = arith.maximumf %61, %62 : vector<8x256xf32>
    %c0_18 = arith.constant 0 : index
    %c0_19 = arith.constant 0 : index
    %c0_20 = arith.constant 0 : index
    %64 = vector.load %arg8[%c0_18, %c0_19, %c0_20] : memref<1x8x256xf32, #tpu.memory_space<vmem>>, vector<1x8x256xf32>
    %65 = vector.shape_cast %64 : vector<1x8x256xf32> to vector<8x256xf32>
    %66 = vector.shape_cast %63 : vector<8x256xf32> to vector<1x8x256xf32>
    tpu.vector_store %arg8[%c0_18, %c0_19, %c0_20], %66 {strides = array<i32>} : memref<1x8x256xf32, #tpu.memory_space<vmem>>, vector<1x8x256xf32>,
    return
  }
  func.func @transform_0(%arg0: i32) -> (i32, i32, i32) {
    %c0_i32 = arith.constant 0 : i32
    %c0_i32_0 = arith.constant 0 : i32
    %c0_i32_1 = arith.constant 0 : i32
    return %arg0, %c0_i32, %c0_i32_0 : i32, i32, i32
  }
  func.func @transform_1(%arg0: i32) -> (i32, i32) {
    %c0_i32 = arith.constant 0 : i32
    %c0_i32_0 = arith.constant 0 : i32
    %c0_i32_1 = arith.constant 0 : i32
    return %c0_i32, %c0_i32_0 : i32, i32
  }
  func.func @transform_2(%arg0: i32) -> (i32, i32) {
    %c0_i32 = arith.constant 0 : i32
    %c0_i32_0 = arith.constant 0 : i32
    %c0_i32_1 = arith.constant 0 : i32
    return %c0_i32, %c0_i32_0 : i32, i32
  }
  func.func @transform_3(%arg0: i32) -> (i32, i32) {
    %c0_i32 = arith.constant 0 : i32
    %c0_i32_0 = arith.constant 0 : i32
    %c0_i32_1 = arith.constant 0 : i32
    return %c0_i32, %c0_i32_0 : i32, i32
  }
  func.func @transform_4(%arg0: i32) -> (i32, i32) {
    %c0_i32 = arith.constant 0 : i32
    %c0_i32_0 = arith.constant 0 : i32
    %c0_i32_1 = arith.constant 0 : i32
    return %c0_i32, %c0_i32_0 : i32, i32
  }
  func.func @transform_5(%arg0: i32) -> (i32, i32) {
    %c0_i32 = arith.constant 0 : i32
    %c0_i32_0 = arith.constant 0 : i32
    %c0_i32_1 = arith.constant 0 : i32
    return %c0_i32, %c0_i32_0 : i32, i32
  }
  func.func @transform_6(%arg0: i32) -> (i32, i32) {
    %c0_i32 = arith.constant 0 : i32
    %c0_i32_0 = arith.constant 0 : i32
    %c0_i32_1 = arith.constant 0 : i32
    return %c0_i32, %c0_i32_0 : i32, i32
  }
  func.func @transform_7(%arg0: i32) -> (i32, i32, i32) {
    %c0_i32 = arith.constant 0 : i32
    %c0_i32_0 = arith.constant 0 : i32
    %c0_i32_1 = arith.constant 0 : i32
    return %arg0, %c0_i32, %c0_i32_0 : i32, i32, i32
  }
}

</mosaic_0001>

<llo_original>
// kernel: tpu_custom_call.1
$region0: #{tpu_custom_call.1}
  #allocation0 [shape = 'u32[]', space=smem, size = 0x4, offset = 0x4, fixed_abs, tag = 'smem constant byte address 0x4 - core index']
  #allocation1 [shape = 'u32[72,128]{1,0:T(1,128)}', space=vmem, size = 0x9000, scoped, tag = 'internal scratch']
  %s0 = inlined_call_operand.hbm [shape: f32[2,8,272], index: 0, kind: input, shape index: {}]
  %s1 = inlined_call_operand.vmem [shape: f32[8,136], index: 1, kind: input, shape index: {}]
  %s2 = inlined_call_operand.vmem [shape: f32[8,136], index: 2, kind: input, shape index: {}]
  %s3 = inlined_call_operand.vmem [shape: f32[8,1], index: 3, kind: input, shape index: {}]
  %s4 = inlined_call_operand.vmem [shape: f32[8,1], index: 4, kind: input, shape index: {}]
  %s5 = inlined_call_operand.vmem [shape: f32[8,1], index: 5, kind: input, shape index: {}]
  %s6 = inlined_call_operand.vmem [shape: f32[8,1], index: 6, kind: input, shape index: {}]
  %s7 = inlined_call_operand.hbm [shape: f32[2,8,256], index: 7, kind: output, shape index: {}]
  %s8 = sld [smem:[#allocation0]]
  $region65: #{tpu_custom_call.1} parent=0
    _
  %s10 = ssub.s32 1, %s8
  %s11 = scalar_select 0, %s10, %s8
  $region1: #{tpu_custom_call.1} parent=0
    #allocation2 [shape = 'u8[24576]{0}', space=vmem, size = 0x6000, scoped, tag = 'input window, operand 0']
    #allocation3 [shape = 's32[2]{0}', space=sflag, size = 0x8, scoped, tag = 'scoped memory for tpu_custom_call.1']
    #allocation4 [shape = 's32[2]{0}', space=sflag, size = 0x8, scoped, tag = 'scoped memory for tpu_custom_call.1']
    #allocation5 [shape = 'u8[16384]{0}', space=vmem, size = 0x4000, scoped, tag = 'output window, operand 0']
    %12 = vsyncpa [#allocation3], 0
    %s13 = scalar_lea.sflag [#allocation3], 1
    %14 = vsyncpa %s13, 0
    %15 = vsyncpa [#allocation4], 0
    %s16 = scalar_lea.sflag [#allocation4], 1
    %17 = vsyncpa %s16, 0
    loop: start=0, step=1, limit=4
    $region2: #{tpu_custom_call.1} parent=1 // loop_pre_header
      _
    $region3: #{tpu_custom_call.1} parent=1 // loop_header
      %s19 = sphi 0, %s23
      %p20 = scmp.ge.s32.totalorder %s19, 4
      %s29 = sphi 0, %s31
      %s32 = sphi 0, %s29
      %s33 = sphi 0, %s32
      %s49 = sphi 0, %s33
      %s53 = sphi 0, %s53
      %s55 = sphi 0, %s53
      %s56 = sphi 0, %s55
      %s70 = sphi 0, %s56
      %s74 = sphi 0, %s74
      %s76 = sphi 0, %s74
      %s77 = sphi 0, %s76
      %s91 = sphi 0, %s77
      %s95 = sphi 0, %s95
      %s97 = sphi 0, %s95
      %s98 = sphi 0, %s97
      %s112 = sphi 0, %s98
      %s116 = sphi 0, %s116
      %s118 = sphi 0, %s116
      %s119 = sphi 0, %s118
      %s133 = sphi 0, %s119
      %s137 = sphi 0, %s137
      %s139 = sphi 0, %s137
      %s140 = sphi 0, %s139
      %s154 = sphi 0, %s140
      %s158 = sphi 0, %s158
      %s160 = sphi 0, %s158
      %s161 = sphi 0, %s160
      %s175 = sphi 0, %s161
      %s181 = sphi 0, %s183
      %s184 = sphi 0, %s181
      %s185 = sphi 0, %s184
      %s201 = sphi 0, %s185
    $region4: #{tpu_custom_call.1} parent=1 // loop_header_branch
      %22 = sbr.rel (%p20) target = $region8
    $region5: #{tpu_custom_call.1} parent=1 // loop_body
      %s24 = ssub.s32 %s19, 1
      %s25 = ssub.s32 %s19, 2
      %s26 = sadd.s32 %s19, 1
      %s27 = ssub.s32 %s19, %s26
      %p28 = scmp.eq.s32.totalorder %s27, 0
      %s30 = sadd.s32 %s29, 1
      %s31 = scalar_select %p28, %s29, %s30
      %p34 = pneg %p28
      %p35 = scmp.eq.s32.totalorder %s19, 1
      %p36 = por %p34, %p35
      %p37 = scmp.ne.s32.totalorder %s29, %s32
      %p38 = scmp.eq.s32.totalorder %s19, 0
      %p39 = por %p37, %p38
      %p40 = scmp.ne.s32.totalorder %s29, %s32
      %p41 = scmp.eq.s32.totalorder %s24, 1
      %p42 = por %p40, %p41
      %p43 = scmp.ne.s32.totalorder %s32, %s33
      %p44 = scmp.eq.s32.totalorder %s24, 0
      %p45 = por %p43, %p44
      %p46 = scmp.ne.s32.totalorder %s32, %s33
      %p47 = scmp.eq.s32.totalorder %s25, 1
      %p48 = por %p46, %p47
      %p50 = scmp.ne.s32.totalorder %s33, %s49
      %p51 = scmp.eq.s32.totalorder %s25, 0
      %p52 = por %p50, %p51
      %s54 = sadd.s32 %s53, 1
      %p57 = scmp.eq.s32.totalorder %s19, 1
      %p58 = scmp.ne.s32.totalorder %s53, %s55
      %p59 = scmp.eq.s32.totalorder %s19, 0
      %p60 = por %p58, %p59
      %p61 = scmp.ne.s32.totalorder %s53, %s55
      %p62 = scmp.eq.s32.totalorder %s24, 1
      %p63 = por %p61, %p62
      %p64 = scmp.ne.s32.totalorder %s55, %s56
      %p65 = scmp.eq.s32.totalorder %s24, 0
      %p66 = por %p64, %p65
      %p67 = scmp.ne.s32.totalorder %s55, %s56
      %p68 = scmp.eq.s32.totalorder %s25, 1
      %p69 = por %p67, %p68
      %p71 = scmp.ne.s32.totalorder %s56, %s70
      %p72 = scmp.eq.s32.totalorder %s25, 0
      %p73 = por %p71, %p72
      %s75 = sadd.s32 %s74, 1
      %p78 = scmp.eq.s32.totalorder %s19, 1
      %p79 = scmp.ne.s32.totalorder %s74, %s76
      %p80 = scmp.eq.s32.totalorder %s19, 0
      %p81 = por %p79, %p80
      %p82 = scmp.ne.s32.totalorder %s74, %s76
      %p83 = scmp.eq.s32.totalorder %s24, 1
      %p84 = por %p82, %p83
      %p85 = scmp.ne.s32.totalorder %s76, %s77
      %p86 = scmp.eq.s32.totalorder %s24, 0
      %p87 = por %p85, %p86
      %p88 = scmp.ne.s32.totalorder %s76, %s77
      %p89 = scmp.eq.s32.totalorder %s25, 1
      %p90 = por %p88, %p89
      %p92 = scmp.ne.s32.totalorder %s77, %s91
      %p93 = scmp.eq.s32.totalorder %s25, 0
      %p94 = por %p92, %p93
      %s96 = sadd.s32 %s95, 1
      %p99 = scmp.eq.s32.totalorder %s19, 1
      %p100 = scmp.ne.s32.totalorder %s95, %s97
      %p101 = scmp.eq.s32.totalorder %s19, 0
      %p102 = por %p100, %p101
      %p103 = scmp.ne.s32.totalorder %s95, %s97
      %p104 = scmp.eq.s32.totalorder %s24, 1
      %p105 = por %p103, %p104
      %p106 = scmp.ne.s32.totalorder %s97, %s98
      %p107 = scmp.eq.s32.totalorder %s24, 0
      %p108 = por %p106, %p107
      %p109 = scmp.ne.s32.totalorder %s97, %s98
      %p110 = scmp.eq.s32.totalorder %s25, 1
      %p111 = por %p109, %p110
      %p113 = scmp.ne.s32.totalorder %s98, %s112
      %p114 = scmp.eq.s32.totalorder %s25, 0
      %p115 = por %p113, %p114
      %s117 = sadd.s32 %s116, 1
      %p120 = scmp.eq.s32.totalorder %s19, 1
      %p121 = scmp.ne.s32.totalorder %s116, %s118
      %p122 = scmp.eq.s32.totalorder %s19, 0
      %p123 = por %p121, %p122
      %p124 = scmp.ne.s32.totalorder %s116, %s118
      %p125 = scmp.eq.s32.totalorder %s24, 1
      %p126 = por %p124, %p125
      %p127 = scmp.ne.s32.totalorder %s118, %s119
      %p128 = scmp.eq.s32.totalorder %s24, 0
      %p129 = por %p127, %p128
      %p130 = scmp.ne.s32.totalorder %s118, %s119
      %p131 = scmp.eq.s32.totalorder %s25, 1
      %p132 = por %p130, %p131
      %p134 = scmp.ne.s32.totalorder %s119, %s133
      %p135 = scmp.eq.s32.totalorder %s25, 0
      %p136 = por %p134, %p135
      %s138 = sadd.s32 %s137, 1
      %p141 = scmp.eq.s32.totalorder %s19, 1
      %p142 = scmp.ne.s32.totalorder %s137, %s139
      %p143 = scmp.eq.s32.totalorder %s19, 0
      %p144 = por %p142, %p143
      %p145 = scmp.ne.s32.totalorder %s137, %s139
      %p146 = scmp.eq.s32.totalorder %s24, 1
      %p147 = por %p145, %p146
      %p148 = scmp.ne.s32.totalorder %s139, %s140
      %p149 = scmp.eq.s32.totalorder %s24, 0
      %p150 = por %p148, %p149
      %p151 = scmp.ne.s32.totalorder %s139, %s140
      %p152 = scmp.eq.s32.totalorder %s25, 1
      %p153 = por %p151, %p152
      %p155 = scmp.ne.s32.totalorder %s140, %s154
      %p156 = scmp.eq.s32.totalorder %s25, 0
      %p157 = por %p155, %p156
      %s159 = sadd.s32 %s158, 1
      %p162 = scmp.eq.s32.totalorder %s19, 1
      %p163 = scmp.ne.s32.totalorder %s158, %s160
      %p164 = scmp.eq.s32.totalorder %s19, 0
      %p165 = por %p163, %p164
      %p166 = scmp.ne.s32.totalorder %s158, %s160
      %p167 = scmp.eq.s32.totalorder %s24, 1
      %p168 = por %p166, %p167
      %p169 = scmp.ne.s32.totalorder %s160, %s161
      %p170 = scmp.eq.s32.totalorder %s24, 0
      %p171 = por %p169, %p170
      %p172 = scmp.ne.s32.totalorder %s160, %s161
      %p173 = scmp.eq.s32.totalorder %s25, 1
      %p174 = por %p172, %p173
      %p176 = scmp.ne.s32.totalorder %s161, %s175
      %p177 = scmp.eq.s32.totalorder %s25, 0
      %p178 = por %p176, %p177
      %s179 = ssub.s32 %s19, %s26
      %p180 = scmp.eq.s32.totalorder %s179, 0
      %s182 = sadd.s32 %s181, 1
      %s183 = scalar_select %p180, %s181, %s182
      %p186 = pneg %p180
      %p187 = scmp.eq.s32.totalorder %s19, 1
      %p188 = por %p186, %p187
      %p189 = scmp.ne.s32.totalorder %s181, %s184
      %p190 = scmp.eq.s32.totalorder %s19, 0
      %p191 = por %p189, %p190
      %p192 = scmp.ne.s32.totalorder %s181, %s184
      %p193 = scmp.eq.s32.totalorder %s24, 1
      %p194 = por %p192, %p193
      %p195 = scmp.ne.s32.totalorder %s184, %s185
      %p196 = scmp.eq.s32.totalorder %s24, 0
      %p197 = por %p195, %p196
      %p198 = scmp.ne.s32.totalorder %s184, %s185
      %p199 = scmp.eq.s32.totalorder %s25, 1
      %p200 = por %p198, %p199
      %p202 = scmp.ne.s32.totalorder %s185, %s201
      %p203 = scmp.eq.s32.totalorder %s25, 0
      %p204 = por %p202, %p203
      %p205 = scmp.le.s32.totalorder 1, %s19
      %p206 = scmp.lt.s32.totalorder %s19, 3
      %p207 = pnand %p205, %p206
      %p208 = pneg %p207
      // Predicated region
      $region9: #{tpu_custom_call.1} parent=5 // pred_check
        _
      $region10: #{tpu_custom_call.1} parent=5 // pred_check_branch
        %210 = sbr.rel (%p207) target = $region12
      $region11: #{tpu_custom_call.1} parent=5 // pred_region
        %s211 = ssub.s32 %s19, 1
        // Predicated region
        $region13: #{tpu_custom_call.1} parent=11 // pred_check
          %p212 = pneg %p66
        $region14: #{tpu_custom_call.1} parent=11 // pred_check_branch
          %214 = sbr.rel (%p212) target = $region16
        $region15: #{tpu_custom_call.1} parent=11 // pred_region
          _
        $region16: #{tpu_custom_call.1} parent=11 // pred_fallthru
          _
        // Predicated region
        $region17: #{tpu_custom_call.1} parent=11 // pred_check
          %p215 = pneg %p87
        $region18: #{tpu_custom_call.1} parent=11 // pred_check_branch
          %217 = sbr.rel (%p215) target = $region20
        $region19: #{tpu_custom_call.1} parent=11 // pred_region
          _
        $region20: #{tpu_custom_call.1} parent=11 // pred_fallthru
          _
        // Predicated region
        $region21: #{tpu_custom_call.1} parent=11 // pred_check
          %p218 = pneg %p108
        $region22: #{tpu_custom_call.1} parent=11 // pred_check_branch
          %220 = sbr.rel (%p218) target = $region24
        $region23: #{tpu_custom_call.1} parent=11 // pred_region
          _
        $region24: #{tpu_custom_call.1} parent=11 // pred_fallthru
          _
        // Predicated region
        $region25: #{tpu_custom_call.1} parent=11 // pred_check
          %p221 = pneg %p129
        $region26: #{tpu_custom_call.1} parent=11 // pred_check_branch
          %223 = sbr.rel (%p221) target = $region28
        $region27: #{tpu_custom_call.1} parent=11 // pred_region
          _
        $region28: #{tpu_custom_call.1} parent=11 // pred_fallthru
          _
        // Predicated region
        $region29: #{tpu_custom_call.1} parent=11 // pred_check
          %p224 = pneg %p150
        $region30: #{tpu_custom_call.1} parent=11 // pred_check_branch
          %226 = sbr.rel (%p224) target = $region32
        $region31: #{tpu_custom_call.1} parent=11 // pred_region
          _
        $region32: #{tpu_custom_call.1} parent=11 // pred_fallthru
          _
        // Predicated region
        $region33: #{tpu_custom_call.1} parent=11 // pred_check
          %p227 = pneg %p171
        $region34: #{tpu_custom_call.1} parent=11 // pred_check_branch
          %229 = sbr.rel (%p227) target = $region36
        $region35: #{tpu_custom_call.1} parent=11 // pred_region
          _
        $region36: #{tpu_custom_call.1} parent=11 // pred_fallthru
          _
      $region12: #{tpu_custom_call.1} parent=5 // pred_fallthru
        _
      %p230 = scmp.lt.s32.totalorder %s19, 2
      // Predicated region
      $region37: #{tpu_custom_call.1} parent=5 // pred_check
        %p231 = pneg %p230
      $region38: #{tpu_custom_call.1} parent=5 // pred_check_branch
        %233 = sbr.rel (%p231) target = $region40
      $region39: #{tpu_custom_call.1} parent=5 // pred_region
        // Predicated region
        $region41: #{tpu_custom_call.1} parent=39 // pred_check
          %p234 = pneg %p39
        $region42: #{tpu_custom_call.1} parent=39 // pred_check_branch
          %236 = sbr.rel (%p234) target = $region44
        $region43: #{tpu_custom_call.1} parent=39 // pred_region
          %s237 = sand.u32 %s29, 1
          %s238 = scalar_lea.sflag [#allocation3], %s237
          %s239 = sand.u32 %s29, 1
          %s240 = smul.addr %s239, 24
          %s241 = scalar_lea.vmem [#allocation2], %s240
          %243 = vsyncadd %s238, 0
          %s244 = smul.addr %s19, 3
          %s245 = smul.addr %s244, 8
          %s246 = scalar_lea.hbm %s0, %s245
          %s248 = sshll.u32 %s246, 4
          %s249 = int_to_ptr.hbm [resolvable:$true] %s248
          %s250 = sshll.u32 %s241, 4
          %s251 = int_to_ptr.vmem [resolvable:$true] %s250
          %253 = dma.hbm_to_vmem [thread:$0]  %s249, 384, %s251, %s238
        $region44: #{tpu_custom_call.1} parent=39 // pred_fallthru
          _
      $region40: #{tpu_custom_call.1} parent=5 // pred_fallthru
        _
      %p254 = scmp.le.s32.totalorder 1, %s19
      %p255 = scmp.lt.s32.totalorder %s19, 3
      %p256 = pnand %p254, %p255
      %p257 = pneg %p256
      // Predicated region
      $region45: #{tpu_custom_call.1} parent=5 // pred_check
        _
      $region46: #{tpu_custom_call.1} parent=5 // pred_check_branch
        %259 = sbr.rel (%p256) target = $region48
      $region47: #{tpu_custom_call.1} parent=5 // pred_region
        %s260 = ssub.s32 %s19, 1
        %s261 = sand.u32 %s32, 1
        %s262 = scalar_lea.sflag [#allocation3], %s261
        %s263 = sand.u32 %s32, 1
        %s264 = smul.addr %s263, 24
        %s265 = scalar_lea.vmem [#allocation2], %s264
        // Predicated region
        $region49: #{tpu_custom_call.1} parent=47 // pred_check
          %p266 = pneg %p45
        $region50: #{tpu_custom_call.1} parent=47 // pred_check_branch
          %268 = sbr.rel (%p266) target = $region52
        $region51: #{tpu_custom_call.1} parent=47 // pred_region
          %270 = dma.done %s262, 384
        $region52: #{tpu_custom_call.1} parent=47 // pred_fallthru
          _
        %s271 = sand.u32 %s32, 1
        %s272 = scalar_lea.sflag [#allocation3], %s271
        %s273 = sand.u32 %s32, 1
        %s274 = smul.addr %s273, 24
        %s275 = scalar_lea.vmem [#allocation2], %s274
        %p276 = pneg %p45
        %p277 = pneg %p42
        %p278 = pneg %p66
        %p279 = pneg %p63
        %p280 = pneg %p87
        %p281 = pneg %p84
        %p282 = pneg %p108
        %p283 = pneg %p105
        %p284 = pneg %p129
        %p285 = pneg %p126
        %p286 = pneg %p150
        %p287 = pneg %p147
        %p288 = pneg %p171
        %p289 = pneg %p168
        %p290 = pneg %p197
        %p291 = pneg %p194
        %s292 = sand.u32 %s184, 1
        %s293 = scalar_lea.sflag [#allocation4], %s292
        %s294 = sand.u32 %s184, 1
        %s295 = smul.addr %s294, 16
        %s296 = scalar_lea.vmem [#allocation5], %s295
        %v297 = vld [vmem:[%s265] sm:$0xff]
        %v298 = vld [vmem:[%s265 + $0x8] sm:$0xff]
        %v299 = vld [vmem:[%s265 + $0x10] sm:$0xff]
        %303 = vrot.lane.b32.xlu0 %v297, 127
        %v304 = vpop.permute.xlu0 %303
        %305 = vrot.lane.b32.xlu0 %v298, 127
        %v306 = vpop.permute.xlu0 %305
        %307 = vrot.lane.b32.xlu0 %v299, 127
        %v308 = vpop.permute.xlu0 %307
        %vm309 = vcmask 1039360
        %v310 = vsel %vm309, %v304, %v306
        %v311 = vsel %vm309, %v306, %v308
        %314 = vrot.lane.b32.xlu0 %v297, 126
        %v315 = vpop.permute.xlu0 %314
        %316 = vrot.lane.b32.xlu0 %v298, 126
        %v317 = vpop.permute.xlu0 %316
        %318 = vrot.lane.b32.xlu0 %v299, 126
        %v319 = vpop.permute.xlu0 %318
        %vm320 = vcmask 1031168
        %v321 = vsel %vm320, %v315, %v317
        %v322 = vsel %vm320, %v317, %v319
        %325 = vrot.lane.b32.xlu0 %v297, 125
        %v326 = vpop.permute.xlu0 %325
        %327 = vrot.lane.b32.xlu0 %v298, 125
        %v328 = vpop.permute.xlu0 %327
        %329 = vrot.lane.b32.xlu0 %v299, 125
        %v330 = vpop.permute.xlu0 %329
        %vm331 = vcmask 1022976
        %v332 = vsel %vm331, %v326, %v328
        %v333 = vsel %vm331, %v328, %v330
        %336 = vrot.lane.b32.xlu0 %v297, 124
        %v337 = vpop.permute.xlu0 %336
        %338 = vrot.lane.b32.xlu0 %v298, 124
        %v339 = vpop.permute.xlu0 %338
        %340 = vrot.lane.b32.xlu0 %v299, 124
        %v341 = vpop.permute.xlu0 %340
        %vm342 = vcmask 1014784
        %v343 = vsel %vm342, %v337, %v339
        %v344 = vsel %vm342, %v339, %v341
        %347 = vrot.lane.b32.xlu0 %v297, 123
        %v348 = vpop.permute.xlu0 %347
        %349 = vrot.lane.b32.xlu0 %v298, 123
        %v350 = vpop.permute.xlu0 %349
        %351 = vrot.lane.b32.xlu0 %v299, 123
        %v352 = vpop.permute.xlu0 %351
        %vm353 = vcmask 1006592
        %v354 = vsel %vm353, %v348, %v350
        %v355 = vsel %vm353, %v350, %v352
        %358 = vrot.lane.b32.xlu0 %v297, 122
        %v359 = vpop.permute.xlu0 %358
        %360 = vrot.lane.b32.xlu0 %v298, 122
        %v361 = vpop.permute.xlu0 %360
        %362 = vrot.lane.b32.xlu0 %v299, 122
        %v363 = vpop.permute.xlu0 %362
        %vm364 = vcmask 998400
        %v365 = vsel %vm364, %v359, %v361
        %v366 = vsel %vm364, %v361, %v363
        %369 = vrot.lane.b32.xlu0 %v297, 121
        %v370 = vpop.permute.xlu0 %369
        %371 = vrot.lane.b32.xlu0 %v298, 121
        %v372 = vpop.permute.xlu0 %371
        %373 = vrot.lane.b32.xlu0 %v299, 121
        %v374 = vpop.permute.xlu0 %373
        %vm375 = vcmask 990208
        %v376 = vsel %vm375, %v370, %v372
        %v377 = vsel %vm375, %v372, %v374
        %380 = vrot.lane.b32.xlu0 %v297, 120
        %v381 = vpop.permute.xlu0 %380
        %382 = vrot.lane.b32.xlu0 %v298, 120
        %v383 = vpop.permute.xlu0 %382
        %384 = vrot.lane.b32.xlu0 %v299, 120
        %v385 = vpop.permute.xlu0 %384
        %vm386 = vcmask 982016
        %v387 = vsel %vm386, %v381, %v383
        %v388 = vsel %vm386, %v383, %v385
        %391 = vrot.lane.b32.xlu0 %v297, 119
        %v392 = vpop.permute.xlu0 %391
        %393 = vrot.lane.b32.xlu0 %v298, 119
        %v394 = vpop.permute.xlu0 %393
        %395 = vrot.lane.b32.xlu0 %v299, 119
        %v396 = vpop.permute.xlu0 %395
        %vm397 = vcmask 973824
        %v398 = vsel %vm397, %v392, %v394
        %v399 = vsel %vm397, %v394, %v396
        %402 = vrot.lane.b32.xlu0 %v297, 118
        %v403 = vpop.permute.xlu0 %402
        %404 = vrot.lane.b32.xlu0 %v298, 118
        %v405 = vpop.permute.xlu0 %404
        %406 = vrot.lane.b32.xlu0 %v299, 118
        %v407 = vpop.permute.xlu0 %406
        %vm408 = vcmask 965632
        %v409 = vsel %vm408, %v403, %v405
        %v410 = vsel %vm408, %v405, %v407
        %413 = vrot.lane.b32.xlu0 %v297, 117
        %v414 = vpop.permute.xlu0 %413
        %415 = vrot.lane.b32.xlu0 %v298, 117
        %v416 = vpop.permute.xlu0 %415
        %417 = vrot.lane.b32.xlu0 %v299, 117
        %v418 = vpop.permute.xlu0 %417
        %vm419 = vcmask 957440
        %v420 = vsel %vm419, %v414, %v416
        %v421 = vsel %vm419, %v416, %v418
        %424 = vrot.lane.b32.xlu0 %v297, 116
        %v425 = vpop.permute.xlu0 %424
        %426 = vrot.lane.b32.xlu0 %v298, 116
        %v427 = vpop.permute.xlu0 %426
        %428 = vrot.lane.b32.xlu0 %v299, 116
        %v429 = vpop.permute.xlu0 %428
        %vm430 = vcmask 949248
        %v431 = vsel %vm430, %v425, %v427
        %v432 = vsel %vm430, %v427, %v429
        %435 = vrot.lane.b32.xlu0 %v297, 115
        %v436 = vpop.permute.xlu0 %435
        %437 = vrot.lane.b32.xlu0 %v298, 115
        %v438 = vpop.permute.xlu0 %437
        %439 = vrot.lane.b32.xlu0 %v299, 115
        %v440 = vpop.permute.xlu0 %439
        %vm441 = vcmask 941056
        %v442 = vsel %vm441, %v436, %v438
        %v443 = vsel %vm441, %v438, %v440
        %446 = vrot.lane.b32.xlu0 %v297, 114
        %v447 = vpop.permute.xlu0 %446
        %448 = vrot.lane.b32.xlu0 %v298, 114
        %v449 = vpop.permute.xlu0 %448
        %450 = vrot.lane.b32.xlu0 %v299, 114
        %v451 = vpop.permute.xlu0 %450
        %vm452 = vcmask 932864
        %v453 = vsel %vm452, %v447, %v449
        %v454 = vsel %vm452, %v449, %v451
        %457 = vrot.lane.b32.xlu0 %v297, 113
        %v458 = vpop.permute.xlu0 %457
        %459 = vrot.lane.b32.xlu0 %v298, 113
        %v460 = vpop.permute.xlu0 %459
        %461 = vrot.lane.b32.xlu0 %v299, 113
        %v462 = vpop.permute.xlu0 %461
        %vm463 = vcmask 924672
        %v464 = vsel %vm463, %v458, %v460
        %v465 = vsel %vm463, %v460, %v462
        %468 = vrot.lane.b32.xlu0 %v297, 112
        %v469 = vpop.permute.xlu0 %468
        %470 = vrot.lane.b32.xlu0 %v298, 112
        %v471 = vpop.permute.xlu0 %470
        %472 = vrot.lane.b32.xlu0 %v299, 112
        %v473 = vpop.permute.xlu0 %472
        %vm474 = vcmask 916480
        %v475 = vsel %vm474, %v469, %v471
        %v476 = vsel %vm474, %v471, %v473
        %v479 = vld [vmem:[%s1] sm:$0xff]
        %v480 = vld [vmem:[%s1 + $0x8] sm:$0xff]
        %vm481 = vcmask 64512
        %v483 = vsel %vm481, %v480, 0
        %485 = vmatpush.msra.mxu0 %v464
        %486 = vmatpush.msra.mxu0 %v453
        %487 = vmatpush.msra.mxu0 %v442
        %488 = vmatpush.msra.mxu0 %v431
        %489 = vmatpush.msra.mxu0 %v420
        %490 = vmatpush.msra.mxu0 %v409
        %491 = vmatpush.msra.mxu0 %v398
        %492 = vmatpush.msra.mxu0 %v387
        %493 = vmatpush.msra.mxu0 %v376
        %494 = vmatpush.msra.mxu0 %v365
        %495 = vmatpush.msra.mxu0 %v354
        %496 = vmatpush.msra.mxu0 %v343
        %497 = vmatpush.msra.mxu0 %v332
        %498 = vmatpush.msra.mxu0 %v321
        %499 = vmatpush.msra.mxu0 %v310
        %500 = vmatpush.msra.mxu0 %v297
        %501 = vmatmul.f32.gmra.mxu0 %v479
        %v502 = vpop.f32.mrf.mxu0
        %v503 = vadd.f32 0.0, %v502
        %504 = vdwg.mxu0
        %505 = vmatpush.msra.mxu0 0.0
        %506 = vmatpush.msra.mxu0 0.0
        %507 = vmatpush.msra.mxu0 0.0
        %508 = vmatpush.msra.mxu0 0.0
        %509 = vmatpush.msra.mxu0 0.0
        %510 = vmatpush.msra.mxu0 0.0
        %511 = vmatpush.msra.mxu0 0.0
        %512 = vmatpush.msra.mxu0 0.0
        %513 = vmatpush.msra.mxu0 0.0
        %514 = vmatpush.msra.mxu0 0.0
        %515 = vmatpush.msra.mxu0 0.0
        %516 = vmatpush.msra.mxu0 0.0
        %517 = vmatpush.msra.mxu0 0.0
        %518 = vmatpush.msra.mxu0 0.0
        %519 = vmatpush.msra.mxu0 0.0
        %520 = vmatpush.msra.mxu0 %v475
        %521 = vmatmul.f32.gmra.mxu0 %v483
        %v522 = vpop.f32.mrf.mxu0
        %v523 = vadd.f32 %v503, %v522
        %524 = vdwg.mxu0
        %525 = vmatpush.msra.mxu0 %v465
        %526 = vmatpush.msra.mxu0 %v454
        %527 = vmatpush.msra.mxu0 %v443
        %528 = vmatpush.msra.mxu0 %v432
        %529 = vmatpush.msra.mxu0 %v421
        %530 = vmatpush.msra.mxu0 %v410
        %531 = vmatpush.msra.mxu0 %v399
        %532 = vmatpush.msra.mxu0 %v388
        %533 = vmatpush.msra.mxu0 %v377
        %534 = vmatpush.msra.mxu0 %v366
        %535 = vmatpush.msra.mxu0 %v355
        %536 = vmatpush.msra.mxu0 %v344
        %537 = vmatpush.msra.mxu0 %v333
        %538 = vmatpush.msra.mxu0 %v322
        %539 = vmatpush.msra.mxu0 %v311
        %540 = vmatpush.msra.mxu0 %v298
        %541 = vmatmul.f32.gmra.mxu0 %v479
        %v542 = vpop.f32.mrf.mxu0
        %v543 = vadd.f32 0.0, %v542
        %544 = vdwg.mxu0
        %545 = vmatpush.msra.mxu0 0.0
        %546 = vmatpush.msra.mxu0 0.0
        %547 = vmatpush.msra.mxu0 0.0
        %548 = vmatpush.msra.mxu0 0.0
        %549 = vmatpush.msra.mxu0 0.0
        %550 = vmatpush.msra.mxu0 0.0
        %551 = vmatpush.msra.mxu0 0.0
        %552 = vmatpush.msra.mxu0 0.0
        %553 = vmatpush.msra.mxu0 0.0
        %554 = vmatpush.msra.mxu0 0.0
        %555 = vmatpush.msra.mxu0 0.0
        %556 = vmatpush.msra.mxu0 0.0
        %557 = vmatpush.msra.mxu0 0.0
        %558 = vmatpush.msra.mxu0 0.0
        %559 = vmatpush.msra.mxu0 0.0
        %560 = vmatpush.msra.mxu0 %v476
        %561 = vmatmul.f32.gmra.mxu0 %v483
        %v562 = vpop.f32.mrf.mxu0
        %v563 = vadd.f32 %v543, %v562
        %564 = vdwg.mxu0
        %v565 = vld [vmem:[%s3] sm:$0xff]
        %567 = vset.pattern.permute.xlu0 0
        %568 = vperm.xlu0 %567, %v565
        %v569 = vpop.permute.xlu0 %568
        %v571 = vmul.f32 %v523, %v569
        %v572 = vmul.f32 %v563, %v569
        %v573 = vld [vmem:[%s4] sm:$0xff]
        %575 = vset.pattern.permute.xlu0 0
        %576 = vperm.xlu0 %575, %v573
        %v577 = vpop.permute.xlu0 %576
        %v579 = vadd.f32 %v571, %v577
        %v580 = vadd.f32 %v572, %v577
        %v581 = vmax.f32 %v579, 0.0
        %v582 = vmax.f32 %v580, 0.0
        %585 = vrot.lane.b32.xlu0 %v581, 8
        %v586 = vpop.permute.xlu0 %585
        %587 = vrot.lane.b32.xlu0 %v582, 8
        %v588 = vpop.permute.xlu0 %587
        %v589 = vsel %vm481, %v586, %v588
        %v593 = vsel %vm481, 0.0, %v586
        %v594 = vsel %vm481, %v588, 0.0
        %597 = vrot.lane.b32.xlu0 %v593, 127
        %v598 = vpop.permute.xlu0 %597
        %599 = vrot.lane.b32.xlu0 %v589, 127
        %v600 = vpop.permute.xlu0 %599
        %601 = vrot.lane.b32.xlu0 %v594, 127
        %v602 = vpop.permute.xlu0 %601
        %v603 = vsel %vm309, %v598, %v600
        %v604 = vsel %vm309, %v600, %v602
        %607 = vrot.lane.b32.xlu0 %v593, 126
        %v608 = vpop.permute.xlu0 %607
        %609 = vrot.lane.b32.xlu0 %v589, 126
        %v610 = vpop.permute.xlu0 %609
        %611 = vrot.lane.b32.xlu0 %v594, 126
        %v612 = vpop.permute.xlu0 %611
        %v613 = vsel %vm320, %v608, %v610
        %v614 = vsel %vm320, %v610, %v612
        %617 = vrot.lane.b32.xlu0 %v593, 125
        %v618 = vpop.permute.xlu0 %617
        %619 = vrot.lane.b32.xlu0 %v589, 125
        %v620 = vpop.permute.xlu0 %619
        %621 = vrot.lane.b32.xlu0 %v594, 125
        %v622 = vpop.permute.xlu0 %621
        %v623 = vsel %vm331, %v618, %v620
        %v624 = vsel %vm331, %v620, %v622
        %627 = vrot.lane.b32.xlu0 %v593, 124
        %v628 = vpop.permute.xlu0 %627
        %629 = vrot.lane.b32.xlu0 %v589, 124
        %v630 = vpop.permute.xlu0 %629
        %631 = vrot.lane.b32.xlu0 %v594, 124
        %v632 = vpop.permute.xlu0 %631
        %v633 = vsel %vm342, %v628, %v630
        %v634 = vsel %vm342, %v630, %v632
        %637 = vrot.lane.b32.xlu0 %v593, 123
        %v638 = vpop.permute.xlu0 %637
        %639 = vrot.lane.b32.xlu0 %v589, 123
        %v640 = vpop.permute.xlu0 %639
        %641 = vrot.lane.b32.xlu0 %v594, 123
        %v642 = vpop.permute.xlu0 %641
        %v643 = vsel %vm353, %v638, %v640
        %v644 = vsel %vm353, %v640, %v642
        %647 = vrot.lane.b32.xlu0 %v593, 122
        %v648 = vpop.permute.xlu0 %647
        %649 = vrot.lane.b32.xlu0 %v589, 122
        %v650 = vpop.permute.xlu0 %649
        %651 = vrot.lane.b32.xlu0 %v594, 122
        %v652 = vpop.permute.xlu0 %651
        %v653 = vsel %vm364, %v648, %v650
        %v654 = vsel %vm364, %v650, %v652
        %657 = vrot.lane.b32.xlu0 %v593, 121
        %v658 = vpop.permute.xlu0 %657
        %659 = vrot.lane.b32.xlu0 %v589, 121
        %v660 = vpop.permute.xlu0 %659
        %661 = vrot.lane.b32.xlu0 %v594, 121
        %v662 = vpop.permute.xlu0 %661
        %v663 = vsel %vm375, %v658, %v660
        %v664 = vsel %vm375, %v660, %v662
        %667 = vrot.lane.b32.xlu0 %v593, 120
        %v668 = vpop.permute.xlu0 %667
        %669 = vrot.lane.b32.xlu0 %v589, 120
        %v670 = vpop.permute.xlu0 %669
        %671 = vrot.lane.b32.xlu0 %v594, 120
        %v672 = vpop.permute.xlu0 %671
        %v673 = vsel %vm386, %v668, %v670
        %v674 = vsel %vm386, %v670, %v672
        %677 = vrot.lane.b32.xlu0 %v593, 119
        %v678 = vpop.permute.xlu0 %677
        %679 = vrot.lane.b32.xlu0 %v589, 119
        %v680 = vpop.permute.xlu0 %679
        %681 = vrot.lane.b32.xlu0 %v594, 119
        %v682 = vpop.permute.xlu0 %681
        %v683 = vsel %vm397, %v678, %v680
        %v684 = vsel %vm397, %v680, %v682
        %687 = vrot.lane.b32.xlu0 %v593, 118
        %v688 = vpop.permute.xlu0 %687
        %689 = vrot.lane.b32.xlu0 %v589, 118
        %v690 = vpop.permute.xlu0 %689
        %691 = vrot.lane.b32.xlu0 %v594, 118
        %v692 = vpop.permute.xlu0 %691
        %v693 = vsel %vm408, %v688, %v690
        %v694 = vsel %vm408, %v690, %v692
        %697 = vrot.lane.b32.xlu0 %v593, 117
        %v698 = vpop.permute.xlu0 %697
        %699 = vrot.lane.b32.xlu0 %v589, 117
        %v700 = vpop.permute.xlu0 %699
        %701 = vrot.lane.b32.xlu0 %v594, 117
        %v702 = vpop.permute.xlu0 %701
        %v703 = vsel %vm419, %v698, %v700
        %v704 = vsel %vm419, %v700, %v702
        %707 = vrot.lane.b32.xlu0 %v593, 116
        %v708 = vpop.permute.xlu0 %707
        %709 = vrot.lane.b32.xlu0 %v589, 116
        %v710 = vpop.permute.xlu0 %709
        %711 = vrot.lane.b32.xlu0 %v594, 116
        %v712 = vpop.permute.xlu0 %711
        %v713 = vsel %vm430, %v708, %v710
        %v714 = vsel %vm430, %v710, %v712
        %717 = vrot.lane.b32.xlu0 %v593, 115
        %v718 = vpop.permute.xlu0 %717
        %719 = vrot.lane.b32.xlu0 %v589, 115
        %v720 = vpop.permute.xlu0 %719
        %721 = vrot.lane.b32.xlu0 %v594, 115
        %v722 = vpop.permute.xlu0 %721
        %v723 = vsel %vm441, %v718, %v720
        %v724 = vsel %vm441, %v720, %v722
        %727 = vrot.lane.b32.xlu0 %v593, 114
        %v728 = vpop.permute.xlu0 %727
        %729 = vrot.lane.b32.xlu0 %v589, 114
        %v730 = vpop.permute.xlu0 %729
        %731 = vrot.lane.b32.xlu0 %v594, 114
        %v732 = vpop.permute.xlu0 %731
        %v733 = vsel %vm452, %v728, %v730
        %v734 = vsel %vm452, %v730, %v732
        %737 = vrot.lane.b32.xlu0 %v593, 113
        %v738 = vpop.permute.xlu0 %737
        %739 = vrot.lane.b32.xlu0 %v589, 113
        %v740 = vpop.permute.xlu0 %739
        %741 = vrot.lane.b32.xlu0 %v594, 113
        %v742 = vpop.permute.xlu0 %741
        %v743 = vsel %vm463, %v738, %v740
        %v744 = vsel %vm463, %v740, %v742
        %747 = vrot.lane.b32.xlu0 %v593, 112
        %v748 = vpop.permute.xlu0 %747
        %749 = vrot.lane.b32.xlu0 %v589, 112
        %v750 = vpop.permute.xlu0 %749
        %751 = vrot.lane.b32.xlu0 %v594, 112
        %v752 = vpop.permute.xlu0 %751
        %v753 = vsel %vm474, %v748, %v750
        %v754 = vsel %vm474, %v750, %v752
        %v757 = vld [vmem:[%s2] sm:$0xff]
        %v758 = vld [vmem:[%s2 + $0x8] sm:$0xff]
        %v760 = vsel %vm481, %v758, 0
        %762 = vmatpush.msra.mxu0 %v743
        %763 = vmatpush.msra.mxu0 %v733
        %764 = vmatpush.msra.mxu0 %v723
        %765 = vmatpush.msra.mxu0 %v713
        %766 = vmatpush.msra.mxu0 %v703
        %767 = vmatpush.msra.mxu0 %v693
        %768 = vmatpush.msra.mxu0 %v683
        %769 = vmatpush.msra.mxu0 %v673
        %770 = vmatpush.msra.mxu0 %v663
        %771 = vmatpush.msra.mxu0 %v653
        %772 = vmatpush.msra.mxu0 %v643
        %773 = vmatpush.msra.mxu0 %v633
        %774 = vmatpush.msra.mxu0 %v623
        %775 = vmatpush.msra.mxu0 %v613
        %776 = vmatpush.msra.mxu0 %v603
        %777 = vmatpush.msra.mxu0 %v593
        %778 = vmatmul.f32.gmra.mxu0 %v757
        %v779 = vpop.f32.mrf.mxu0
        %v780 = vadd.f32 0.0, %v779
        %781 = vdwg.mxu0
        %782 = vmatpush.msra.mxu0 0.0
        %783 = vmatpush.msra.mxu0 0.0
        %784 = vmatpush.msra.mxu0 0.0
        %785 = vmatpush.msra.mxu0 0.0
        %786 = vmatpush.msra.mxu0 0.0
        %787 = vmatpush.msra.mxu0 0.0
        %788 = vmatpush.msra.mxu0 0.0
        %789 = vmatpush.msra.mxu0 0.0
        %790 = vmatpush.msra.mxu0 0.0
        %791 = vmatpush.msra.mxu0 0.0
        %792 = vmatpush.msra.mxu0 0.0
        %793 = vmatpush.msra.mxu0 0.0
        %794 = vmatpush.msra.mxu0 0.0
        %795 = vmatpush.msra.mxu0 0.0
        %796 = vmatpush.msra.mxu0 0.0
        %797 = vmatpush.msra.mxu0 %v753
        %798 = vmatmul.f32.gmra.mxu0 %v760
        %v799 = vpop.f32.mrf.mxu0
        %v800 = vadd.f32 %v780, %v799
        %801 = vdwg.mxu0
        %802 = vmatpush.msra.mxu0 %v744
        %803 = vmatpush.msra.mxu0 %v734
        %804 = vmatpush.msra.mxu0 %v724
        %805 = vmatpush.msra.mxu0 %v714
        %806 = vmatpush.msra.mxu0 %v704
        %807 = vmatpush.msra.mxu0 %v694
        %808 = vmatpush.msra.mxu0 %v684
        %809 = vmatpush.msra.mxu0 %v674
        %810 = vmatpush.msra.mxu0 %v664
        %811 = vmatpush.msra.mxu0 %v654
        %812 = vmatpush.msra.mxu0 %v644
        %813 = vmatpush.msra.mxu0 %v634
        %814 = vmatpush.msra.mxu0 %v624
        %815 = vmatpush.msra.mxu0 %v614
        %816 = vmatpush.msra.mxu0 %v604
        %817 = vmatpush.msra.mxu0 %v589
        %818 = vmatmul.f32.gmra.mxu0 %v757
        %v819 = vpop.f32.mrf.mxu0
        %v820 = vadd.f32 0.0, %v819
        %821 = vdwg.mxu0
        %822 = vmatpush.msra.mxu0 0.0
        %823 = vmatpush.msra.mxu0 0.0
        %824 = vmatpush.msra.mxu0 0.0
        %825 = vmatpush.msra.mxu0 0.0
        %826 = vmatpush.msra.mxu0 0.0
        %827 = vmatpush.msra.mxu0 0.0
        %828 = vmatpush.msra.mxu0 0.0
        %829 = vmatpush.msra.mxu0 0.0
        %830 = vmatpush.msra.mxu0 0.0
        %831 = vmatpush.msra.mxu0 0.0
        %832 = vmatpush.msra.mxu0 0.0
        %833 = vmatpush.msra.mxu0 0.0
        %834 = vmatpush.msra.mxu0 0.0
        %835 = vmatpush.msra.mxu0 0.0
        %836 = vmatpush.msra.mxu0 0.0
        %837 = vmatpush.msra.mxu0 %v754
        %838 = vmatmul.f32.gmra.mxu0 %v760
        %v839 = vpop.f32.mrf.mxu0
        %v840 = vadd.f32 %v820, %v839
        %841 = vdwg.mxu0
        %v842 = vld [vmem:[%s5] sm:$0xff]
        %844 = vset.pattern.permute.xlu0 0
        %845 = vperm.xlu0 %844, %v842
        %v846 = vpop.permute.xlu0 %845
        %v848 = vmul.f32 %v800, %v846
        %v849 = vmul.f32 %v840, %v846
        %v850 = vld [vmem:[%s6] sm:$0xff]
        %852 = vset.pattern.permute.xlu0 0
        %853 = vperm.xlu0 %852, %v850
        %v854 = vpop.permute.xlu0 %853
        %v856 = vadd.f32 %v848, %v854
        %v857 = vadd.f32 %v849, %v854
        %v858 = vadd.f32 %v856, %v387
        %v859 = vadd.f32 %v857, %v388
        %v860 = vmax.f32 %v858, 0.0
        %v861 = vmax.f32 %v859, 0.0
        %862 = vst [vmem:[%s296] sm:$0xff] %v860
        %863 = vst [vmem:[%s296 + $0x8] sm:$0xff] %v861
        %s864 = sand.u32 %s184, 1
        %s865 = scalar_lea.sflag [#allocation4], %s864
        %s866 = sand.u32 %s184, 1
        %s867 = smul.addr %s866, 16
        %s868 = scalar_lea.vmem [#allocation5], %s867
        // Predicated region
        $region53: #{tpu_custom_call.1} parent=47 // pred_check
          %p869 = pneg %p194
        $region54: #{tpu_custom_call.1} parent=47 // pred_check_branch
          %871 = sbr.rel (%p869) target = $region56
        $region55: #{tpu_custom_call.1} parent=47 // pred_region
          %873 = vsyncadd %s865, 0
          %s874 = smul.addr %s24, 2
          %s875 = smul.addr %s874, 8
          %s876 = scalar_lea.hbm %s7, %s875
          %s878 = sshll.u32 %s868, 4
          %s879 = int_to_ptr.vmem [resolvable:$true] %s878
          %s880 = sshll.u32 %s876, 4
          %s881 = int_to_ptr.hbm [resolvable:$true] %s880
          %883 = dma.vmem_to_hbm [thread:$0]  %s879, 256, %s881, %s865
        $region56: #{tpu_custom_call.1} parent=47 // pred_fallthru
          _
      $region48: #{tpu_custom_call.1} parent=5 // pred_fallthru
        _
      %p884 = scmp.le.s32.totalorder 2, %s19
      // Predicated region
      $region57: #{tpu_custom_call.1} parent=5 // pred_check
        %p885 = pneg %p884
      $region58: #{tpu_custom_call.1} parent=5 // pred_check_branch
        %887 = sbr.rel (%p885) target = $region60
      $region59: #{tpu_custom_call.1} parent=5 // pred_region
        %s888 = ssub.s32 %s19, 2
        // Predicated region
        $region61: #{tpu_custom_call.1} parent=59 // pred_check
          %p889 = pneg %p200
        $region62: #{tpu_custom_call.1} parent=59 // pred_check_branch
          %891 = sbr.rel (%p889) target = $region64
        $region63: #{tpu_custom_call.1} parent=59 // pred_region
          %s892 = sand.u32 %s185, 1
          %s893 = scalar_lea.sflag [#allocation4], %s892
          %s894 = sand.u32 %s185, 1
          %s895 = smul.addr %s894, 16
          %s896 = scalar_lea.vmem [#allocation5], %s895
          %898 = dma.done %s893, 256
        $region64: #{tpu_custom_call.1} parent=59 // pred_fallthru
          _
      $region60: #{tpu_custom_call.1} parent=5 // pred_fallthru
        _
    $region6: #{tpu_custom_call.1} parent=1 // loop_footer
      %s23 = sadd.s32 1, %s19
    $region7: #{tpu_custom_call.1} parent=1 // loop_footer_branch
      %18 = sbr.rel target = $region3
    $region8: #{tpu_custom_call.1} parent=1 // loop_exit
      _
    %899 = vsyncpa [#allocation3], 1
    %s900 = scalar_lea.sflag [#allocation3], 1
    %901 = vsyncpa %s900, 1
    %902 = vsyncpa [#allocation4], 1
    %s903 = scalar_lea.sflag [#allocation4], 1
    %904 = vsyncpa %s903, 1

</llo_original>
